<compile_context>
chip_gen: v6e
topology: v6e:2x2x1
jax: 0.10.0
libtpu: 0.0.40
codegen_flags: <defaults>
</compile_context>

<pallas_src>
import functools

import jax
import jax.numpy as jnp
from jax.experimental import pallas as pl
from jax.experimental.pallas import tpu as pltpu

_EPS = 1e-5
_VMEM_LIMIT_BYTES = 48 * 1024 * 1024      # safe on v5e/v6e (128 MiB) and v7x (64 MiB)
_FUSED_BLOCK_BUDGET = 3 * 1024 * 1024     # f32 bytes per (N, tile_c, HW) block
_ROW_BLOCK_BUDGET = 2 * 1024 * 1024       # f32 bytes per (tile_r, HW) block (fallback)


# --------------------------------------------------------------------------
# Primary path: fused single-pass IBN kernel (1 read + 1 write of the tensor).
# --------------------------------------------------------------------------
def _fused_ibn_kernel(x_ref, p_ref, o_ref):
    """One block = all N batches x tile_c channels x full HW.

    p_ref is (3, tile_c, 1) f32: [0]=weight, [1]=bias, [2]=IN-channel mask.
    IN channels use per-(n, c) stats over HW; BN channels use per-channel
    stats over (N, HW).  Mask-based select => no channel-tile alignment needed.
    """
    x = x_ref[...].astype(jnp.float32)                    # (N, tc, HW)
    p = p_ref[...]                                        # (3, tc, 1)
    w = p[0:1]                                            # (1, tc, 1)
    b = p[1:2]
    is_in = p[2:3] > 0.5                                  # (1, tc, 1) bool

    # Two-pass moments (better conditioned than E[x^2] - mean^2).
    m_row = jnp.mean(x, axis=-1, keepdims=True)           # (N, tc, 1) per (n,c)
    m_bn = jnp.mean(m_row, axis=0, keepdims=True)         # (1, tc, 1) per c over N*HW
    mean = jnp.where(is_in, m_row, m_bn)                  # (N, tc, 1)
    xc = x - mean
    v_row = jnp.mean(xc * xc, axis=-1, keepdims=True)     # IN variance (per row)
    v_bn = jnp.mean(v_row, axis=0, keepdims=True)         # BN variance (per channel)
    var = jnp.where(is_in, v_row, v_bn)

    scale = w * jax.lax.rsqrt(var + _EPS)
    o_ref[...] = (xc * scale + b).astype(o_ref.dtype)


def _fused_forward(x3, params, tile_c):
    N, C, HW = x3.shape
    return pl.pallas_call(
        _fused_ibn_kernel,
        grid=(pl.cdiv(C, tile_c),),
        in_specs=[
            pl.BlockSpec((N, tile_c, HW), lambda i: (0, i, 0)),
            pl.BlockSpec((3, tile_c, 1), lambda i: (0, i, 0)),
        ],
        out_specs=pl.BlockSpec((N, tile_c, HW), lambda i: (0, i, 0)),
        out_shape=jax.ShapeDtypeStruct((N, C, HW), x3.dtype),
        compiler_params=pltpu.CompilerParams(
            dimension_semantics=("parallel",),
            vmem_limit_bytes=_VMEM_LIMIT_BYTES,
        ),
    )(x3, params)


# --------------------------------------------------------------------------
# Fallback path: two-pass over the (N*C, HW) row slab (large N*HW tensors).
# --------------------------------------------------------------------------
def _row_stats_kernel(x_ref, s1_ref, s2_ref):
    # Single-pass per-row moments in f32; rows are independent so garbage
    # stats from a ragged last block are written OOB and dropped.
    x = x_ref[...].astype(jnp.float32)                     # (tile_r, HW)
    s1_ref[...] = jnp.sum(x, axis=-1, keepdims=True)       # (tile_r, 1)
    s2_ref[...] = jnp.sum(x * x, axis=-1, keepdims=True)   # (tile_r, 1)


def _row_affine_kernel(x_ref, ss_ref, o_ref):
    # out[r, :] = x[r, :] * scale[r] + shift[r]; ss packs (scale, shift).
    x = x_ref[...].astype(jnp.float32)                     # (tile_r, HW)
    o_ref[...] = (x * ss_ref[:, 0:1] + ss_ref[:, 1:2]).astype(o_ref.dtype)


def _pick_row_tile(R, HW):
    """Row tile: multiple of 8 (or == R when R <= 8), sized to ~budget."""
    if R <= 8:
        return R
    fit = (_ROW_BLOCK_BUDGET // (HW * 4)) // 8 * 8
    return min((R // 8) * 8, max(8, fit))


def _row_slab_forward(x2d, ss, tile_r):
    R, HW = x2d.shape
    return pl.pallas_call(
        _row_affine_kernel,
        grid=(pl.cdiv(R, tile_r),),
        in_specs=[
            pl.BlockSpec((tile_r, HW), lambda i: (i, 0)),
            pl.BlockSpec((tile_r, 2), lambda i: (i, 0)),
        ],
        out_specs=pl.BlockSpec((tile_r, HW), lambda i: (i, 0)),
        out_shape=jax.ShapeDtypeStruct((R, HW), x2d.dtype),
        compiler_params=pltpu.CompilerParams(
            dimension_semantics=("parallel",),
            vmem_limit_bytes=_VMEM_LIMIT_BYTES,
        ),
    )(x2d, ss)


def _row_slab_stats(x2d, tile_r):
    R, HW = x2d.shape
    return pl.pallas_call(
        _row_stats_kernel,
        grid=(pl.cdiv(R, tile_r),),
        in_specs=[pl.BlockSpec((tile_r, HW), lambda i: (i, 0))],
        out_specs=(
            pl.BlockSpec((tile_r, 1), lambda i: (i, 0)),
            pl.BlockSpec((tile_r, 1), lambda i: (i, 0)),
        ),
        out_shape=(
            jax.ShapeDtypeStruct((R, 1), jnp.float32),
            jax.ShapeDtypeStruct((R, 1), jnp.float32),
        ),
        compiler_params=pltpu.CompilerParams(
            dimension_semantics=("parallel",),
            vmem_limit_bytes=_VMEM_LIMIT_BYTES,
        ),
    )(x2d)


# --------------------------------------------------------------------------
# Wrapper.
# --------------------------------------------------------------------------
@functools.partial(jax.jit, static_argnames=("half", "force_two_pass"))
def ibn_a_forward(x, in_weight, in_bias, bn_weight, bn_bias, *, half,
                  force_two_pass=False):
    """x: (N, C, H, W).  Returns (N, C, H, W) matching IBN_a.forward."""
    N, C, H, W = x.shape
    HW = H * W
    x3 = x.reshape(N, C, HW)                    # contiguous reshape: free

    w_full = jnp.concatenate([in_weight, bn_weight]).astype(jnp.float32)  # (C,)
    b_full = jnp.concatenate([in_bias, bn_bias]).astype(jnp.float32)      # (C,)

    # ---- channel tile for the fused single-pass kernel (static math) ----
    if C <= 8:
        tile_c = C                               # block dim == full array dim
    else:
        per_ch_f32 = N * HW * 4
        fit = (_FUSED_BLOCK_BUDGET // max(1, per_ch_f32)) // 8 * 8
        tile_c = max(8, min((C // 8) * 8, fit))  # multiple of 8, <= C
    fused_ok = (not force_two_pass) and (N * tile_c * HW * 4 <= _FUSED_BLOCK_BUDGET)

    if fused_ok:
        in_mask = (jnp.arange(C) < half).astype(jnp.float32)
        params = jnp.stack([w_full, b_full, in_mask], axis=0).reshape(3, C, 1)
        out3 = _fused_forward(x3, params, tile_c)
        return out3.reshape(N, C, H, W)

    # ---------------- fallback: two-pass over (N*C, HW) rows ----------------
    R = N * C
    x2d = x3.reshape(R, HW)
    tile_r = _pick_row_tile(R, HW)

    s1, s2 = _row_slab_stats(x2d, tile_r)

    # Tiny O(N*C) glue: select IN (per-row) vs BN (per-channel over N) moments
    # and fold weight/bias into a packed per-row (scale, shift).
    inv_hw = jnp.float32(1.0 / HW)
    mean_nc = (s1[:, 0] * inv_hw).reshape(N, C)
    ex2_nc = (s2[:, 0] * inv_hw).reshape(N, C)
    cmask = (jnp.arange(C) < half)[None, :]
    mean_bn = jnp.mean(mean_nc, axis=0, keepdims=True)
    ex2_bn = jnp.mean(ex2_nc, axis=0, keepdims=True)
    mean_sel = jnp.where(cmask, mean_nc, mean_bn)
    ex2_sel = jnp.where(cmask, ex2_nc, ex2_bn)
    # TODO(synk): E[x^2]-mean^2 (clamped) can lose precision for very
    # ill-conditioned activations; the fused path uses a true two-pass variance.
    var_sel = jnp.maximum(ex2_sel - mean_sel * mean_sel, 0.0)
    scale = w_full[None, :] * jax.lax.rsqrt(var_sel + _EPS)
    shift = b_full[None, :] - mean_sel * scale
    ss = jnp.stack([scale, shift], axis=-1).reshape(R, 2).astype(jnp.float32)

    out2d = _row_slab_forward(x2d, ss, tile_r)
    return out2d.reshape(N, C, H, W)


# --------------------------------------------------------------------------
# Pure-JAX reference of the PyTorch forward (training-mode BN).
# --------------------------------------------------------------------------
def _reference(x, in_weight, in_bias, bn_weight, bn_bias, half):
    x1 = x[:, :half].astype(jnp.float32)
    x2 = x[:, half:].astype(jnp.float32)
    m1 = x1.mean(axis=(2, 3), keepdims=True)
    v1 = ((x1 - m1) ** 2).mean(axis=(2, 3), keepdims=True)
    o1 = (x1 - m1) / jnp.sqrt(v1 + _EPS)
    o1 = o1 * in_weight.reshape(1, -1, 1, 1) + in_bias.reshape(1, -1, 1, 1)
    m2 = x2.mean(axis=(0, 2, 3), keepdims=True)
    v2 = ((x2 - m2) ** 2).mean(axis=(0, 2, 3), keepdims=True)
    o2 = (x2 - m2) / jnp.sqrt(v2 + _EPS)
    o2 = o2 * bn_weight.reshape(1, -1, 1, 1) + bn_bias.reshape(1, -1, 1, 1)
    return jnp.concatenate([o1, o2], axis=1)


if __name__ == "__main__":
    N, C, H, W = 2, 4, 16, 16
    half1 = C // 2
    half2 = C - half1

    key = jax.random.PRNGKey(0)
    kx, k1, k2, k3, k4 = jax.random.split(key, 5)
    x = jax.random.normal(kx, (N, C, H, W), dtype=jnp.float32)

    # PyTorch defaults are weight=1, bias=0; perturb so the affine path is
    # actually exercised.
    in_weight = 1.0 + 0.1 * jax.random.normal(k1, (half1,), dtype=jnp.float32)
    in_bias = 0.1 * jax.random.normal(k2, (half1,), dtype=jnp.float32)
    bn_weight = 1.0 + 0.1 * jax.random.normal(k3, (half2,), dtype=jnp.float32)
    bn_bias = 0.1 * jax.random.normal(k4, (half2,), dtype=jnp.float32)

    ref = _reference(x, in_weight, in_bias, bn_weight, bn_bias, half1)

    # Primary fused single-pass path.
    out = ibn_a_forward(x, in_weight, in_bias, bn_weight, bn_bias, half=half1)
    out = jax.block_until_ready(out)
    assert out.shape == (N, C, H, W)
    assert jnp.allclose(out, ref, atol=1e-4, rtol=1e-4), "fused path mismatch"

    # Fallback two-pass path (exercised explicitly so both paths are verified).
    out_fb = ibn_a_forward(x, in_weight, in_bias, bn_weight, bn_bias,
                           half=half1, force_two_pass=True)
    out_fb = jax.block_until_ready(out_fb)
    assert jnp.allclose(out_fb, ref, atol=1e-4, rtol=1e-4), "fallback mismatch"

    print("KERNEL_OK")
</pallas_src>

<mosaic_0001>
module attributes {stable_mosaic.version = 11 : i64} {
  func.func @_fused_ibn_kernel(%arg0: i32, %arg1: memref<2x4x256xf32, #tpu.memory_space<vmem>>, %arg2: memref<3x4x1xf32, #tpu.memory_space<vmem>>, %arg3: memref<2x4x256xf32, #tpu.memory_space<vmem>>) attributes {dimension_semantics = [#tpu.dimension_semantics<parallel>], iteration_bounds = array<i64: 1>, scalar_prefetch = 0 : i64, scratch_operands = 0 : i64, tpu.core_type = #tpu.core_type<tc>, window_params = [{transform_indices = @transform_0, window_bounds = array<i64: 2, 4, 256>}, {transform_indices = @transform_1, window_bounds = array<i64: 3, 4, 1>}, {transform_indices = @transform_2, window_bounds = array<i64: 2, 4, 256>}]} {
    %c0 = arith.constant 0 : index
    %c0_0 = arith.constant 0 : index
    %c0_1 = arith.constant 0 : index
    %0 = vector.load %arg1[%c0, %c0_0, %c0_1] : memref<2x4x256xf32, #tpu.memory_space<vmem>>, vector<2x4x256xf32>
    %c0_2 = arith.constant 0 : index
    %c0_3 = arith.constant 0 : index
    %c0_4 = arith.constant 0 : index
    %1 = vector.load %arg2[%c0_2, %c0_3, %c0_4] : memref<3x4x1xf32, #tpu.memory_space<vmem>>, vector<3x4x1xf32>
    %2 = vector.extract_strided_slice %1 {offsets = [0, 0, 0], sizes = [1, 4, 1], strides = [1, 1, 1]} : vector<3x4x1xf32> to vector<1x4x1xf32>
    %3 = vector.extract_strided_slice %1 {offsets = [1, 0, 0], sizes = [1, 4, 1], strides = [1, 1, 1]} : vector<3x4x1xf32> to vector<1x4x1xf32>
    %4 = vector.extract_strided_slice %1 {offsets = [2, 0, 0], sizes = [1, 4, 1], strides = [1, 1, 1]} : vector<3x4x1xf32> to vector<1x4x1xf32>
    %cst = arith.constant 5.000000e-01 : f32
    %5 = vector.broadcast %cst : f32 to vector<1x4x1xf32>
    %6 = arith.cmpf ogt, %4, %5 : vector<1x4x1xf32>
    %cst_5 = arith.constant dense<0.000000e+00> : vector<2x4xf32>
    %7 = vector.multi_reduction <add>, %0, %cst_5 [2] : vector<2x4x256xf32> to vector<2x4xf32>
    %8 = vector.shape_cast %7 : vector<2x4xf32> to vector<2x4x1xf32>
    %cst_6 = arith.constant 2.560000e+02 : f32
    %9 = vector.broadcast %cst_6 : f32 to vector<2x4x1xf32>
    %10 = arith.divf %8, %9 : vector<2x4x1xf32>
    %cst_7 = arith.constant dense<0.000000e+00> : vector<4x1xf32>
    %11 = vector.multi_reduction <add>, %10, %cst_7 [0] : vector<2x4x1xf32> to vector<4x1xf32>
    %12 = vector.shape_cast %11 : vector<4x1xf32> to vector<1x4x1xf32>
    %cst_8 = arith.constant 2.000000e+00 : f32
    %13 = vector.broadcast %cst_8 : f32 to vector<1x4x1xf32>
    %14 = arith.divf %12, %13 : vector<1x4x1xf32>
    %15 = vector.shape_cast %6 : vector<1x4x1xi1> to vector<1x4x1xi1>
    %16 = vector.broadcast %15 : vector<1x4x1xi1> to vector<2x4x1xi1>
    %17 = vector.shape_cast %14 : vector<1x4x1xf32> to vector<1x4x1xf32>
    %18 = vector.broadcast %17 : vector<1x4x1xf32> to vector<2x4x1xf32>
    %19 = arith.select %16, %10, %18 : vector<2x4x1xi1>, vector<2x4x1xf32>
    %20 = vector.broadcast %19 : vector<2x4x1xf32> to vector<2x4x256xf32>
    %21 = arith.subf %0, %20 : vector<2x4x256xf32>
    %22 = arith.mulf %21, %21 : vector<2x4x256xf32>
    %cst_9 = arith.constant dense<0.000000e+00> : vector<2x4xf32>
    %23 = vector.multi_reduction <add>, %22, %cst_9 [2] : vector<2x4x256xf32> to vector<2x4xf32>
    %24 = vector.shape_cast %23 : vector<2x4xf32> to vector<2x4x1xf32>
    %cst_10 = arith.constant 2.560000e+02 : f32
    %25 = vector.broadcast %cst_10 : f32 to vector<2x4x1xf32>
    %26 = arith.divf %24, %25 : vector<2x4x1xf32>
    %cst_11 = arith.constant dense<0.000000e+00> : vector<4x1xf32>
    %27 = vector.multi_reduction <add>, %26, %cst_11 [0] : vector<2x4x1xf32> to vector<4x1xf32>
    %28 = vector.shape_cast %27 : vector<4x1xf32> to vector<1x4x1xf32>
    %cst_12 = arith.constant 2.000000e+00 : f32
    %29 = vector.broadcast %cst_12 : f32 to vector<1x4x1xf32>
    %30 = arith.divf %28, %29 : vector<1x4x1xf32>
    %31 = vector.shape_cast %6 : vector<1x4x1xi1> to vector<1x4x1xi1>
    %32 = vector.broadcast %31 : vector<1x4x1xi1> to vector<2x4x1xi1>
    %33 = vector.shape_cast %30 : vector<1x4x1xf32> to vector<1x4x1xf32>
    %34 = vector.broadcast %33 : vector<1x4x1xf32> to vector<2x4x1xf32>
    %35 = arith.select %32, %26, %34 : vector<2x4x1xi1>, vector<2x4x1xf32>
    %cst_13 = arith.constant 9.99999974E-6 : f32
    %36 = vector.broadcast %cst_13 : f32 to vector<2x4x1xf32>
    %37 = arith.addf %35, %36 : vector<2x4x1xf32>
    %38 = math.rsqrt %37 : vector<2x4x1xf32>
    %39 = vector.broadcast %2 : vector<1x4x1xf32> to vector<2x4x1xf32>
    %40 = arith.mulf %39, %38 : vector<2x4x1xf32>
    %41 = vector.broadcast %40 : vector<2x4x1xf32> to vector<2x4x256xf32>
    %42 = arith.mulf %21, %41 : vector<2x4x256xf32>
    %43 = vector.broadcast %3 : vector<1x4x1xf32> to vector<2x4x256xf32>
    %44 = arith.addf %42, %43 : vector<2x4x256xf32>
    %c0_14 = arith.constant 0 : index
    %c0_15 = arith.constant 0 : index
    %c0_16 = arith.constant 0 : index
    %45 = vector.load %arg3[%c0_14, %c0_15, %c0_16] : memref<2x4x256xf32, #tpu.memory_space<vmem>>, vector<2x4x256xf32>
    tpu.vector_store %arg3[%c0_14, %c0_15, %c0_16], %44 {strides = array<i32>} : memref<2x4x256xf32, #tpu.memory_space<vmem>>, vector<2x4x256xf32>,
    return
  }
  func.func @transform_0(%arg0: i32) -> (i32, i32, i32) {
    %c0_i32 = arith.constant 0 : i32
    %c0_i32_0 = arith.constant 0 : i32
    %c0_i32_1 = arith.constant 0 : i32
    return %c0_i32, %arg0, %c0_i32_0 : i32, i32, i32
  }
  func.func @transform_1(%arg0: i32) -> (i32, i32, i32) {
    %c0_i32 = arith.constant 0 : i32
    %c0_i32_0 = arith.constant 0 : i32
    %c0_i32_1 = arith.constant 0 : i32
    return %c0_i32, %arg0, %c0_i32_0 : i32, i32, i32
  }
  func.func @transform_2(%arg0: i32) -> (i32, i32, i32) {
    %c0_i32 = arith.constant 0 : i32
    %c0_i32_0 = arith.constant 0 : i32
    %c0_i32_1 = arith.constant 0 : i32
    return %c0_i32, %arg0, %c0_i32_0 : i32, i32, i32
  }
}

</mosaic_0001>

<llo_original>
// kernel: ibn_a_forward.1
$region0: #{ibn_a_forward.1}
  #allocation0 [shape = 'u32[]', space=smem, size = 0x4, offset = 0x4, fixed_abs, tag = 'smem constant byte address 0x4 - core index']
  #allocation1 [shape = 'u32[144,128]{1,0:T(1,128)}', space=vmem, size = 0x12000, scoped, tag = 'internal scratch']
  %s0 = inlined_call_operand.vmem [shape: f32[2,4,256], index: 0, kind: input, shape index: {}]
  %s1 = inlined_call_operand.vmem [shape: f32[3,4,1], index: 1, kind: input, shape index: {}]
  %s2 = inlined_call_operand.vmem [shape: f32[2,4,256], index: 2, kind: output, shape index: {}]
  %s3 = sld [smem:[#allocation0]]
  $region18: #{ibn_a_forward.1} parent=0
    _
  %s5 = ssub.s32 1, %s3
  %s6 = scalar_select 0, %s5, %s3
  // Predicated region
  $region2: #{ibn_a_forward.1} parent=0 // pred_check
    _
  $region3: #{ibn_a_forward.1} parent=0 // pred_check_branch
    %8 = sbr.rel (0) target = $region5
  $region4: #{ibn_a_forward.1} parent=0 // pred_region
    _
  $region5: #{ibn_a_forward.1} parent=0 // pred_fallthru
    _
  // Predicated region
  $region6: #{ibn_a_forward.1} parent=0 // pred_check
    _
  $region7: #{ibn_a_forward.1} parent=0 // pred_check_branch
    %10 = sbr.rel (0) target = $region9
  $region8: #{ibn_a_forward.1} parent=0 // pred_region
    _
  $region9: #{ibn_a_forward.1} parent=0 // pred_fallthru
    _
  %v11 = vld [vmem:[%s0] sm:$0xff]
  %v12 = vld [vmem:[%s0 + $0x8] sm:$0xff]
  %v13 = vld [vmem:[%s1] sm:$0xf]
  %v14 = vld [vmem:[%s1 + $0x4] sm:$0xf]
  %v15 = vld [vmem:[%s1 + $0x8] sm:$0xf]
  %vm16 = vcmp.gt.f32.partialorder %v15, 0.5
  %v19 = vcombine.high %v11, %v11
  %v20 = vcombine.high %v12, %v12
  %vm23 = vcmask 1043456
  %v24 = vsel %vm23, %v11, 0.0
  %v25 = vsel %vm23, %v19, 0.0
  %v26 = vadd.f32 %v24, %v25
  %27 = vadd.xlane.f32.xlu0 %v26
  %v28 = vpop.xlane.xlu0 %27
  %v29 = vsel %vm23, %v12, 0.0
  %v30 = vsel %vm23, %v20, 0.0
  %v31 = vadd.f32 %v29, %v30
  %32 = vadd.xlane.f32.xlu0 %v31
  %v33 = vpop.xlane.xlu0 %32
  %v34 = vrcp.pop 256.0
  %v35 = vmul.f32 %v28, %v34
  %v36 = vmul.f32 %v33, %v34
  %v37 = vsel %vm23, %v35, 0.0
  %v38 = vsel %vm23, %v36, 0.0
  %v39 = vadd.f32 %v37, %v38
  %v40 = vrcp.pop 2.0
  %v41 = vmul.f32 %v39, %v40
  %v42 = vsel %vm16, 1, 0
  %vm43 = vcmp.eq.s32.totalorder %v42, 1
  %v44 = vsel %vm43, %v35, %v41
  %v45 = vsel %vm43, %v36, %v41
  %47 = vset.pattern.permute.xlu0 0
  %48 = vperm.xlu0 %47, %v44
  %v49 = vpop.permute.xlu0 %48
  %51 = vset.pattern.permute.xlu0 0
  %52 = vperm.xlu0 %51, %v45
  %v53 = vpop.permute.xlu0 %52
  %v55 = vunpack.c.l.s4 839922192
  %v56 = vunpack.c.0.s8 %v55
  %v57 = vlaneseq
  %v58 = vshrl.u32 %v57, 7
  %v59 = vsub.s32 %v56, %v58
  %v60 = vrot.slane %v49, %v59
  %v62 = vunpack.c.l.s4 839922192
  %v63 = vunpack.c.0.s8 %v62
  %v64 = vlaneseq
  %v65 = vshrl.u32 %v64, 7
  %v66 = vsub.s32 %v63, %v65
  %v67 = vrot.slane %v53, %v66
  %v70 = vsub.f32 %v11, %v60
  %v71 = vsub.f32 %v12, %v67
  %v72 = vmul.f32 %v70, %v70
  %v73 = vmul.f32 %v71, %v71
  %v76 = vcombine.high %v72, %v72
  %v77 = vcombine.high %v73, %v73
  %v80 = vsel %vm23, %v72, 0.0
  %v81 = vsel %vm23, %v76, 0.0
  %v82 = vadd.f32 %v80, %v81
  %83 = vadd.xlane.f32.xlu0 %v82
  %v84 = vpop.xlane.xlu0 %83
  %v85 = vsel %vm23, %v73, 0.0
  %v86 = vsel %vm23, %v77, 0.0
  %v87 = vadd.f32 %v85, %v86
  %88 = vadd.xlane.f32.xlu0 %v87
  %v89 = vpop.xlane.xlu0 %88
  %v90 = vmul.f32 %v84, %v34
  %v91 = vmul.f32 %v89, %v34
  %v92 = vsel %vm23, %v90, 0.0
  %v93 = vsel %vm23, %v91, 0.0
  %v94 = vadd.f32 %v92, %v93
  %v95 = vmul.f32 %v94, %v40
  %v96 = vsel %vm43, %v90, %v95
  %v97 = vsel %vm43, %v91, %v95
  %v98 = vadd.f32 %v96, 1e-05
  %v99 = vadd.f32 %v97, 1e-05
  %v100 = vrsqrt.pop %v98
  %v101 = vrsqrt.pop %v99
  %v102 = vmul.f32 %v13, %v100
  %v103 = vmul.f32 %v13, %v101
  %105 = vset.pattern.permute.xlu0 0
  %106 = vperm.xlu0 %105, %v102
  %v107 = vpop.permute.xlu0 %106
  %109 = vset.pattern.permute.xlu0 0
  %110 = vperm.xlu0 %109, %v103
  %v111 = vpop.permute.xlu0 %110
  %v113 = vunpack.c.l.s4 839922192
  %v114 = vunpack.c.0.s8 %v113
  %v115 = vlaneseq
  %v116 = vshrl.u32 %v115, 7
  %v117 = vsub.s32 %v114, %v116
  %v118 = vrot.slane %v107, %v117
  %v120 = vunpack.c.l.s4 839922192
  %v121 = vunpack.c.0.s8 %v120
  %v122 = vlaneseq
  %v123 = vshrl.u32 %v122, 7
  %v124 = vsub.s32 %v121, %v123
  %v125 = vrot.slane %v111, %v124
  %v128 = vmul.f32 %v70, %v118
  %v129 = vmul.f32 %v71, %v125
  %131 = vset.pattern.permute.xlu0 0
  %132 = vperm.xlu0 %131, %v14
  %v133 = vpop.permute.xlu0 %132
  %v135 = vunpack.c.l.s4 839922192
  %v136 = vunpack.c.0.s8 %v135
  %v137 = vlaneseq
  %v138 = vshrl.u32 %v137, 7
  %v139 = vsub.s32 %v136, %v138
  %v140 = vrot.slane %v133, %v139
  %v142 = vadd.f32 %v128, %v140
  %v143 = vadd.f32 %v129, %v140
  %144 = vst [vmem:[%s2] sm:$0xff] %v142
  %145 = vst [vmem:[%s2 + $0x8] sm:$0xff] %v143
  // Predicated region
  $region10: #{ibn_a_forward.1} parent=0 // pred_check
    _
  $region11: #{ibn_a_forward.1} parent=0 // pred_check_branch
    %147 = sbr.rel (0) target = $region13
  $region12: #{ibn_a_forward.1} parent=0 // pred_region
    _
  $region13: #{ibn_a_forward.1} parent=0 // pred_fallthru
    _
  // Predicated region
  $region14: #{ibn_a_forward.1} parent=0 // pred_check
    _
  $region15: #{ibn_a_forward.1} parent=0 // pred_check_branch
    %149 = sbr.rel (0) target = $region17
  $region16: #{ibn_a_forward.1} parent=0 // pred_region
    _
  $region17: #{ibn_a_forward.1} parent=0 // pred_fallthru
    _

</llo_original>
